<compile_context>
chip_gen: v7x
topology: tpu7x:2x2x1
jax: 0.10.0
libtpu: 0.0.40
codegen_flags: <defaults>
</compile_context>

<pallas_src>
from collections import namedtuple
import math

import jax
import jax.numpy as jnp
from jax.experimental import pallas as pl
from jax.experimental.pallas import tpu as pltpu

LANE = 128  # TPU lane width

TargetNetParams = namedtuple("TargetNetParams", ["w1", "w2", "bias", "out_features"])


def _targetnet_kernel(x_ref, w1_ref, w2_ref, b_ref, o_ref):
    # --- features: full-spatial Conv2d == matmul over flattened C*H*W, + bias, ReLU
    x_bf = x_ref[...].astype(jnp.bfloat16)                       # (N, K1)
    h = jnp.dot(x_bf, w1_ref[...],                               # (K1, 128) pre-transposed bf16
                preferred_element_type=jnp.float32)              # (N, 128), f32 accumulate
    h = jnp.maximum(h + b_ref[0:1, :], 0.0)                      # f32 epilogue, lane-dense

    # x.view(N, 64) is a no-op: columns 0..63 of h are exactly the (N, 64) features;
    # columns 64..127 are zero and are annihilated by the zero-padded w2 rows.

    # --- fc: Linear(64 -> OUT), OUT zero-padded to 128 for a lane-dense store
    y = jnp.dot(h.astype(jnp.bfloat16), w2_ref[...],             # (128, 128) pre-transposed bf16
                preferred_element_type=jnp.float32)              # (N, 128)
    o_ref[...] = (y + b_ref[1:2, :]).astype(o_ref.dtype)         # single unmasked vreg store


def prepare_params(conv_w, conv_b, fc_w, fc_b):
    """One-time parameter prep (reshape, transpose, zero-pad, bf16 cast).

    conv_w: (64, C, H, W); conv_b: (64,); fc_w: (OUT, 64); fc_b: (OUT,)."""
    o1 = conv_w.shape[0]                                   # 64 (forced by .view(N, 64))
    k1 = int(math.prod(conv_w.shape[1:]))                  # C*H*W
    out = fc_w.shape[0]
    hid_pad = LANE                                         # hidden 64 -> 128
    out_pad = max(LANE, ((out + LANE - 1) // LANE) * LANE)  # OUT -> 128

    # (K1, 128) bf16 — transposed + hidden-padded once, host-side.
    w1 = jnp.pad(conv_w.reshape(o1, k1).T, ((0, 0), (0, hid_pad - o1))).astype(jnp.bfloat16)
    # (128, 128) bf16 — transposed + padded on both axes once, host-side.
    w2 = jnp.pad(fc_w.T, ((0, hid_pad - o1), (0, out_pad - out))).astype(jnp.bfloat16)
    # Both biases packed into one lane-dense (2, 128) f32 slab.
    bias = jnp.stack([jnp.pad(conv_b, (0, hid_pad - o1)),
                      jnp.pad(fc_b, (0, out_pad - out))]).astype(jnp.float32)
    return TargetNetParams(w1=w1, w2=w2, bias=bias, out_features=out)


def targetnet_forward(x_nchw, params):
    """Hot path. x_nchw: (N, C, H, W). Returns the lane-dense (N, 128) slab;
    the logical output is [:, :params.out_features]."""
    n = x_nchw.shape[0]
    k1 = params.w1.shape[0]
    out_pad = params.w2.shape[1]
    x_flat = x_nchw.reshape(n, k1)          # contiguous row-major flatten == PyTorch .view

    vmem = lambda: pl.BlockSpec(memory_space=pltpu.MemorySpace.VMEM)
    cost = pl.CostEstimate(
        flops=2 * n * (k1 * LANE + LANE * out_pad),
        transcendentals=0,
        bytes_accessed=(x_flat.size * 4            # f32 input
                        + params.w1.size * 2       # bf16 weights
                        + params.w2.size * 2
                        + params.bias.size * 4     # f32 bias slab
                        + n * out_pad * 4))        # f32 output

    return pl.pallas_call(
        _targetnet_kernel,
        out_shape=jax.ShapeDtypeStruct((n, out_pad), jnp.float32),
        in_specs=[vmem(), vmem(), vmem(), vmem()],
        out_specs=vmem(),
        cost_estimate=cost,
    )(x_flat, params.w1, params.w2, params.bias)


if __name__ == "__main__":
    # Small deterministic shapes consistent with the module's forward.
    N, C, H, W = 2, 4, 8, 8            # C*H*W = 256 = one full MXU contraction pass
    FEAT, OUT = 64, 10

    key = jax.random.PRNGKey(0)
    kx, kw1, kb1, kw2, kb2 = jax.random.split(key, 5)

    x = jax.random.normal(kx, (N, C, H, W), dtype=jnp.float32)
    conv_w = jax.random.normal(kw1, (FEAT, C, H, W), dtype=jnp.float32) * 0.05
    conv_b = jax.random.normal(kb1, (FEAT,), dtype=jnp.float32) * 0.05
    fc_w = jax.random.normal(kw2, (OUT, FEAT), dtype=jnp.float32) * 0.05
    fc_b = jax.random.normal(kb2, (OUT,), dtype=jnp.float32) * 0.05

    # One-time prep (outside the hot path), then the fused forward.
    params = prepare_params(conv_w, conv_b, fc_w, fc_b)
    params = jax.tree_util.tree_map(
        lambda a: jax.block_until_ready(a) if isinstance(a, jax.Array) else a, params)

    out_slab = targetnet_forward(x, params)
    out_slab = jax.block_until_ready(out_slab)
    out = out_slab[:, :params.out_features]   # consumer-side slice of the padded slab

    # Pure-JAX f32 reference (same math as torch Conv2d(full kernel)+ReLU+Linear).
    x_flat = x.reshape(N, C * H * W)
    ref = jnp.maximum(x_flat @ conv_w.reshape(FEAT, -1).T + conv_b, 0.0) @ fc_w.T + fc_b
    assert out.shape == (N, OUT)
    # bf16 MXU operands (f32 accumulate) -> loosened tolerance vs the f32 reference.
    assert jnp.allclose(out, ref, atol=5e-2, rtol=5e-2), "mismatch vs reference"
    # Padded output lanes must be exactly zero-bias contributions (sanity).
    assert jnp.allclose(out_slab[:, OUT:], 0.0, atol=5e-2)

    print("KERNEL_OK")
</pallas_src>

<mosaic_0001>
module attributes {stable_mosaic.version = 11 : i64} {
  func.func @_targetnet_kernel(%arg0: memref<2x256xf32, #tpu.memory_space<vmem>>, %arg1: memref<256x128xbf16, #tpu.memory_space<vmem>>, %arg2: memref<128x128xbf16, #tpu.memory_space<vmem>>, %arg3: memref<2x128xf32, #tpu.memory_space<vmem>>, %arg4: memref<2x128xf32, #tpu.memory_space<vmem>>) attributes {dimension_semantics = [], scalar_prefetch = 0 : i64, scratch_operands = 0 : i64, tpu.core_type = #tpu.core_type<tc>} {
    %c0 = arith.constant 0 : index
    %c0_0 = arith.constant 0 : index
    %0 = vector.load %arg0[%c0, %c0_0] : memref<2x256xf32, #tpu.memory_space<vmem>>, vector<2x256xf32>
    %1 = arith.truncf %0 : vector<2x256xf32> to vector<2x256xbf16>
    %c0_1 = arith.constant 0 : index
    %c0_2 = arith.constant 0 : index
    %2 = vector.load %arg1[%c0_1, %c0_2] : memref<256x128xbf16, #tpu.memory_space<vmem>>, vector<256x128xbf16>
    %cst = arith.constant dense<0.000000e+00> : vector<2x128xf32>
    %3 = tpu.matmul %1, %2, %cst {dimension_numbers = #tpu.dot_dimension_numbers<[1], [0], [0], [1], [0, 0, 1, 1], [], []>} : vector<2x256xbf16>, vector<256x128xbf16>, vector<2x128xf32> -> vector<2x128xf32>
    %c0_3 = arith.constant 0 : index
    %c0_4 = arith.constant 0 : index
    %4 = vector.load %arg3[%c0_3, %c0_4] : memref<2x128xf32, #tpu.memory_space<vmem>>, vector<1x128xf32>
    %5 = vector.broadcast %4 : vector<1x128xf32> to vector<2x128xf32>
    %6 = arith.addf %3, %5 : vector<2x128xf32>
    %cst_5 = arith.constant 0.000000e+00 : f32
    %7 = vector.broadcast %cst_5 : f32 to vector<2x128xf32>
    %8 = arith.maximumf %6, %7 : vector<2x128xf32>
    %9 = arith.truncf %8 : vector<2x128xf32> to vector<2x128xbf16>
    %c0_6 = arith.constant 0 : index
    %c0_7 = arith.constant 0 : index
    %10 = vector.load %arg2[%c0_6, %c0_7] : memref<128x128xbf16, #tpu.memory_space<vmem>>, vector<128x128xbf16>
    %cst_8 = arith.constant dense<0.000000e+00> : vector<2x128xf32>
    %11 = tpu.matmul %9, %10, %cst_8 {dimension_numbers = #tpu.dot_dimension_numbers<[1], [0], [0], [1], [0, 0, 1, 1], [], []>} : vector<2x128xbf16>, vector<128x128xbf16>, vector<2x128xf32> -> vector<2x128xf32>
    %c1 = arith.constant 1 : index
    %c0_9 = arith.constant 0 : index
    %12 = vector.load %arg3[%c1, %c0_9] : memref<2x128xf32, #tpu.memory_space<vmem>>, vector<1x128xf32>
    %13 = vector.broadcast %12 : vector<1x128xf32> to vector<2x128xf32>
    %14 = arith.addf %11, %13 : vector<2x128xf32>
    %c0_10 = arith.constant 0 : index
    %c0_11 = arith.constant 0 : index
    %15 = vector.load %arg4[%c0_10, %c0_11] : memref<2x128xf32, #tpu.memory_space<vmem>>, vector<2x128xf32>
    tpu.vector_store %arg4[%c0_10, %c0_11], %14 {strides = array<i32>} : memref<2x128xf32, #tpu.memory_space<vmem>>, vector<2x128xf32>,
    return
  }
}

</mosaic_0001>

<llo_original>
// kernel: tpu_custom_call.1
$region0: #{tpu_custom_call.1}
  #allocation0 [shape = 'u32[]', space=smem, size = 0x4, offset = 0x4, fixed_abs, tag = 'smem constant byte address 0x4 - core index']
  #allocation1 [shape = 'u32[144,128]{1,0:T(1,128)}', space=vmem, size = 0x12000, scoped, tag = 'internal scratch']
  %s0 = inlined_call_operand.hbm [shape: f32[2,256], index: 0, kind: input, shape index: {}]
  %s1 = inlined_call_operand.hbm [shape: bf16[256,128], index: 1, kind: input, shape index: {}]
  %s2 = inlined_call_operand.hbm [shape: bf16[128,128], index: 2, kind: input, shape index: {}]
  %s3 = inlined_call_operand.vmem [shape: f32[2,128], index: 3, kind: input, shape index: {}]
  %s4 = inlined_call_operand.hbm [shape: f32[2,128], index: 4, kind: output, shape index: {}]
  %s5 = sld [smem:[#allocation0]]
  $region38: #{tpu_custom_call.1} parent=0
    _
  %s7 = ssub.s32 1, %s5
  %s8 = scalar_select 0, %s7, %s5
  $region1: #{tpu_custom_call.1} parent=0
    #allocation2 [shape = 'u8[2048]{0}', space=vmem, size = 0x800, scoped, tag = 'input window, operand 0, single buffered']
    #allocation3 [shape = 's32[1]{0}', space=sflag, size = 0x4, scoped, tag = 'scoped memory for tpu_custom_call.1']
    #allocation4 [shape = 's32[1]{0}', space=sflag, size = 0x4, scoped, tag = 'scoped memory for tpu_custom_call.1']
    #allocation5 [shape = 'u8[65536]{0}', space=vmem, size = 0x10000, scoped, tag = 'input window, operand 1, single buffered']
    #allocation6 [shape = 's32[1]{0}', space=sflag, size = 0x4, scoped, tag = 'scoped memory for tpu_custom_call.1']
    #allocation7 [shape = 'u8[32768]{0}', space=vmem, size = 0x8000, scoped, tag = 'input window, operand 2, single buffered']
    #allocation8 [shape = 'u8[1024]{0}', space=vmem, size = 0x400, scoped, tag = 'output window, operand 0, single buffered']
    %9 = vsyncpa [#allocation3], 0
    %10 = vsyncpa [#allocation6], 0
    %11 = vsyncpa [#allocation4], 0
    // Predicated region
    $region2: #{tpu_custom_call.1} parent=1 // pred_check
      _
    $region3: #{tpu_custom_call.1} parent=1 // pred_check_branch
      %13 = sbr.rel (0) target = $region5
    $region4: #{tpu_custom_call.1} parent=1 // pred_region
      %s15 = ssub.s32 64, 64
      %16 = vsyncadd [#allocation3], %s15
      %s18 = sshll.u32 [#allocation2], 4
      %s19 = int_to_ptr.vmem [resolvable:$true] %s18
      %21 = dma.hbm_to_vmem [thread:$0]  %s0, 64, %s19, [#allocation3]
    $region5: #{tpu_custom_call.1} parent=1 // pred_fallthru
      _
    // Predicated region
    $region6: #{tpu_custom_call.1} parent=1 // pred_check
      _
    $region7: #{tpu_custom_call.1} parent=1 // pred_check_branch
      %23 = sbr.rel (0) target = $region9
    $region8: #{tpu_custom_call.1} parent=1 // pred_region
      %s25 = ssub.s32 2048, 2048
      %26 = vsyncadd [#allocation6], %s25
      %s27 = sshll.u32 [#allocation5], 4
      %s28 = int_to_ptr.vmem [resolvable:$true] %s27
      %33 = dma.hbm_to_vmem [thread:$0]  %s1, 2048, %s28, [#allocation6], 64, 64, 4
    $region9: #{tpu_custom_call.1} parent=1 // pred_fallthru
      _
    // Predicated region
    $region10: #{tpu_custom_call.1} parent=1 // pred_check
      _
    $region11: #{tpu_custom_call.1} parent=1 // pred_check_branch
      %35 = sbr.rel (0) target = $region13
    $region12: #{tpu_custom_call.1} parent=1 // pred_region
      %s37 = ssub.s32 1024, 1024
      %38 = vsyncadd [#allocation6], %s37
      %s39 = sshll.u32 [#allocation7], 4
      %s40 = int_to_ptr.vmem [resolvable:$true] %s39
      %45 = dma.hbm_to_vmem [thread:$0]  %s2, 1024, %s40, [#allocation6], 64, 64, 4
    $region13: #{tpu_custom_call.1} parent=1 // pred_fallthru
      _
    // Predicated region
    $region14: #{tpu_custom_call.1} parent=1 // pred_check
      _
    $region15: #{tpu_custom_call.1} parent=1 // pred_check_branch
      %47 = sbr.rel (0) target = $region17
    $region16: #{tpu_custom_call.1} parent=1 // pred_region
      _
    $region17: #{tpu_custom_call.1} parent=1 // pred_fallthru
      _
    // Predicated region
    $region18: #{tpu_custom_call.1} parent=1 // pred_check
      _
    $region19: #{tpu_custom_call.1} parent=1 // pred_check_branch
      %49 = sbr.rel (0) target = $region21
    $region20: #{tpu_custom_call.1} parent=1 // pred_region
      %50 = dma.done [#allocation3], 64
    $region21: #{tpu_custom_call.1} parent=1 // pred_fallthru
      _
    // Predicated region
    $region22: #{tpu_custom_call.1} parent=1 // pred_check
      _
    $region23: #{tpu_custom_call.1} parent=1 // pred_check_branch
      %52 = sbr.rel (0) target = $region25
    $region24: #{tpu_custom_call.1} parent=1 // pred_region
      %53 = dma.done [#allocation6], 2048
    $region25: #{tpu_custom_call.1} parent=1 // pred_fallthru
      _
    // Predicated region
    $region26: #{tpu_custom_call.1} parent=1 // pred_check
      _
    $region27: #{tpu_custom_call.1} parent=1 // pred_check_branch
      %55 = sbr.rel (0) target = $region29
    $region28: #{tpu_custom_call.1} parent=1 // pred_region
      %56 = dma.done [#allocation6], 1024
    $region29: #{tpu_custom_call.1} parent=1 // pred_fallthru
      _
    %v58 = vld [vmem:[#allocation2] sm:$0xf]
    %v61 = vunpack.c.l.s4 1983009808
    %v62 = vunpack.c.0.s8 %v61
    %v63 = vlaneseq
    %v64 = vshrl.u32 %v63, 7
    %v65 = vsub.s32 %v62, %v64
    %v66 = vrot.slane %v58, %v65
    %v67 = vcombine.high %v66, %v66
    %v70 = vpack.c.bf16 %v66, %v66
    %v71 = vpack.c.bf16 %v67, %v67
    %v72 = vld [vmem:[#allocation5] sm:$0xf]
    %v73 = vld [vmem:[#allocation5 + $0x4] sm:$0xf]
    %v74 = vld [vmem:[#allocation5 + $0x8] sm:$0xf]
    %v75 = vld [vmem:[#allocation5 + $0xc] sm:$0xf]
    %v76 = vld [vmem:[#allocation5 + $0x10] sm:$0xf]
    %v77 = vld [vmem:[#allocation5 + $0x14] sm:$0xf]
    %v78 = vld [vmem:[#allocation5 + $0x18] sm:$0xf]
    %v79 = vld [vmem:[#allocation5 + $0x1c] sm:$0xf]
    %v80 = vld [vmem:[#allocation5 + $0x20] sm:$0xf]
    %v81 = vld [vmem:[#allocation5 + $0x24] sm:$0xf]
    %v82 = vld [vmem:[#allocation5 + $0x28] sm:$0xf]
    %v83 = vld [vmem:[#allocation5 + $0x2c] sm:$0xf]
    %v84 = vld [vmem:[#allocation5 + $0x30] sm:$0xf]
    %v85 = vld [vmem:[#allocation5 + $0x34] sm:$0xf]
    %v86 = vld [vmem:[#allocation5 + $0x38] sm:$0xf]
    %v87 = vld [vmem:[#allocation5 + $0x3c] sm:$0xf]
    %v88 = vld [vmem:[#allocation5 + $0x40] sm:$0xf]
    %v89 = vld [vmem:[#allocation5 + $0x44] sm:$0xf]
    %v90 = vld [vmem:[#allocation5 + $0x48] sm:$0xf]
    %v91 = vld [vmem:[#allocation5 + $0x4c] sm:$0xf]
    %v92 = vld [vmem:[#allocation5 + $0x50] sm:$0xf]
    %v93 = vld [vmem:[#allocation5 + $0x54] sm:$0xf]
    %v94 = vld [vmem:[#allocation5 + $0x58] sm:$0xf]
    %v95 = vld [vmem:[#allocation5 + $0x5c] sm:$0xf]
    %v96 = vld [vmem:[#allocation5 + $0x60] sm:$0xf]
    %v97 = vld [vmem:[#allocation5 + $0x64] sm:$0xf]
    %v98 = vld [vmem:[#allocation5 + $0x68] sm:$0xf]
    %v99 = vld [vmem:[#allocation5 + $0x6c] sm:$0xf]
    %v100 = vld [vmem:[#allocation5 + $0x70] sm:$0xf]
    %v101 = vld [vmem:[#allocation5 + $0x74] sm:$0xf]
    %v102 = vld [vmem:[#allocation5 + $0x78] sm:$0xf]
    %v103 = vld [vmem:[#allocation5 + $0x7c] sm:$0xf]
    %v104 = vld [vmem:[%s3] sm:$0x1]
    %v105 = vlaneseq
    %v106 = vshrl.u32 %v105, 7
    %v107 = vsub.s32 0, %v106
    %v108 = vrot.slane %v104, %v107
    %v141 = vunpack.c.l.b16 %v72
    %v142 = vunpack.c.l.b16 %v73
    %v143 = vunpack.c.l.b16 %v74
    %v144 = vunpack.c.l.b16 %v75
    %v145 = vunpack.c.l.b16 %v76
    %v146 = vunpack.c.l.b16 %v77
    %v147 = vunpack.c.l.b16 %v78
    %v148 = vunpack.c.l.b16 %v79
    %v149 = vunpack.c.l.b16 %v80
    %v150 = vunpack.c.l.b16 %v81
    %v151 = vunpack.c.l.b16 %v82
    %v152 = vunpack.c.l.b16 %v83
    %v153 = vunpack.c.l.b16 %v84
    %v154 = vunpack.c.l.b16 %v85
    %v155 = vunpack.c.l.b16 %v86
    %v156 = vunpack.c.l.b16 %v87
    %v157 = vunpack.c.l.b16 %v88
    %v158 = vunpack.c.l.b16 %v89
    %v159 = vunpack.c.l.b16 %v90
    %v160 = vunpack.c.l.b16 %v91
    %v161 = vunpack.c.l.b16 %v92
    %v162 = vunpack.c.l.b16 %v93
    %v163 = vunpack.c.l.b16 %v94
    %v164 = vunpack.c.l.b16 %v95
    %v165 = vunpack.c.l.b16 %v96
    %v166 = vunpack.c.l.b16 %v97
    %v167 = vunpack.c.l.b16 %v98
    %v168 = vunpack.c.l.b16 %v99
    %v169 = vunpack.c.l.b16 %v100
    %v170 = vunpack.c.l.b16 %v101
    %v171 = vunpack.c.l.b16 %v102
    %v172 = vunpack.c.l.b16 %v103
    %v173 = vpack.c.b16 %v142, %v141
    %v174 = vpack.c.b16 %v144, %v143
    %v175 = vpack.c.b16 %v146, %v145
    %v176 = vpack.c.b16 %v148, %v147
    %v177 = vpack.c.b16 %v150, %v149
    %v178 = vpack.c.b16 %v152, %v151
    %v179 = vpack.c.b16 %v154, %v153
    %v180 = vpack.c.b16 %v156, %v155
    %v181 = vpack.c.b16 %v158, %v157
    %v182 = vpack.c.b16 %v160, %v159
    %v183 = vpack.c.b16 %v162, %v161
    %v184 = vpack.c.b16 %v164, %v163
    %v185 = vpack.c.b16 %v166, %v165
    %v186 = vpack.c.b16 %v168, %v167
    %v187 = vpack.c.b16 %v170, %v169
    %v188 = vpack.c.b16 %v172, %v171
    %205 = vmatprep.subr.bf16.mxu0 0
    %206 = vmatpush1.bf16.msra.mxu0 %v173
    %207 = vmatprep.subr.bf16.mxu0 0
    %208 = vmatpush1.bf16.msra.mxu0 %v174
    %209 = vmatprep.subr.bf16.mxu0 0
    %210 = vmatpush1.bf16.msra.mxu0 %v175
    %211 = vmatprep.subr.bf16.mxu0 0
    %212 = vmatpush1.bf16.msra.mxu0 %v176
    %213 = vmatprep.subr.bf16.mxu0 0
    %214 = vmatpush1.bf16.msra.mxu0 %v177
    %215 = vmatprep.subr.bf16.mxu0 0
    %216 = vmatpush1.bf16.msra.mxu0 %v178
    %217 = vmatprep.subr.bf16.mxu0 0
    %218 = vmatpush1.bf16.msra.mxu0 %v179
    %219 = vmatprep.subr.bf16.mxu0 0
    %220 = vmatpush1.bf16.msra.mxu0 %v180
    %221 = vmatprep.subr.bf16.mxu0 0
    %222 = vmatpush1.bf16.msra.mxu0 %v181
    %223 = vmatprep.subr.bf16.mxu0 0
    %224 = vmatpush1.bf16.msra.mxu0 %v182
    %225 = vmatprep.subr.bf16.mxu0 0
    %226 = vmatpush1.bf16.msra.mxu0 %v183
    %227 = vmatprep.subr.bf16.mxu0 0
    %228 = vmatpush1.bf16.msra.mxu0 %v184
    %229 = vmatprep.subr.bf16.mxu0 0
    %230 = vmatpush1.bf16.msra.mxu0 %v185
    %231 = vmatprep.subr.bf16.mxu0 0
    %232 = vmatpush1.bf16.msra.mxu0 %v186
    %233 = vmatprep.subr.bf16.mxu0 0
    %234 = vmatpush1.bf16.msra.mxu0 %v187
    %235 = vmatprep.subr.bf16.mxu0 0
    %236 = vmatpush1.bf16.msra.mxu0 %v188
    %237 = vmatprep.mubr.bf16.mxu0 %v71
    %238 = vmatmul.mubr.bf16.gmra.mrb[0].mxu0 %v70
    %v239 = vpop.f32.mrb[0].mxu0
    %v240 = vadd.f32 %v108, %v239
    %v241 = vpop.f32.mrb[0].mxu0
    %v242 = vpop.f32.mrb[0].mxu0
    %v243 = vpop.f32.mrb[0].mxu0
    %244 = vdwg.mxu0
    %v245 = vmax.f32 %v240, 0.0
    %v246 = vpack.c.bf16 %v245, %v245
    %v247 = vld [vmem:[#allocation7] sm:$0xf]
    %v248 = vld [vmem:[#allocation7 + $0x4] sm:$0xf]
    %v249 = vld [vmem:[#allocation7 + $0x8] sm:$0xf]
    %v250 = vld [vmem:[#allocation7 + $0xc] sm:$0xf]
    %v251 = vld [vmem:[#allocation7 + $0x10] sm:$0xf]
    %v252 = vld [vmem:[#allocation7 + $0x14] sm:$0xf]
    %v253 = vld [vmem:[#allocation7 + $0x18] sm:$0xf]
    %v254 = vld [vmem:[#allocation7 + $0x1c] sm:$0xf]
    %v255 = vld [vmem:[#allocation7 + $0x20] sm:$0xf]
    %v256 = vld [vmem:[#allocation7 + $0x24] sm:$0xf]
    %v257 = vld [vmem:[#allocation7 + $0x28] sm:$0xf]
    %v258 = vld [vmem:[#allocation7 + $0x2c] sm:$0xf]
    %v259 = vld [vmem:[#allocation7 + $0x30] sm:$0xf]
    %v260 = vld [vmem:[#allocation7 + $0x34] sm:$0xf]
    %v261 = vld [vmem:[#allocation7 + $0x38] sm:$0xf]
    %v262 = vld [vmem:[#allocation7 + $0x3c] sm:$0xf]
    %v263 = vld [vmem:[%s3 + $0x1] sm:$0x1]
    %v264 = vlaneseq
    %v265 = vshrl.u32 %v264, 7
    %v266 = vsub.s32 0, %v265
    %v267 = vrot.slane %v263, %v266
    %v284 = vunpack.c.l.b16 %v247
    %v285 = vunpack.c.l.b16 %v248
    %v286 = vunpack.c.l.b16 %v249
    %v287 = vunpack.c.l.b16 %v250
    %v288 = vunpack.c.l.b16 %v251
    %v289 = vunpack.c.l.b16 %v252
    %v290 = vunpack.c.l.b16 %v253
    %v291 = vunpack.c.l.b16 %v254
    %v292 = vunpack.c.l.b16 %v255
    %v293 = vunpack.c.l.b16 %v256
    %v294 = vunpack.c.l.b16 %v257
    %v295 = vunpack.c.l.b16 %v258
    %v296 = vunpack.c.l.b16 %v259
    %v297 = vunpack.c.l.b16 %v260
    %v298 = vunpack.c.l.b16 %v261
    %v299 = vunpack.c.l.b16 %v262
    %v300 = vpack.c.b16 %v285, %v284
    %v301 = vpack.c.b16 %v287, %v286
    %v302 = vpack.c.b16 %v289, %v288
    %v303 = vpack.c.b16 %v291, %v290
    %v304 = vpack.c.b16 %v293, %v292
    %v305 = vpack.c.b16 %v295, %v294
    %v306 = vpack.c.b16 %v297, %v296
    %v307 = vpack.c.b16 %v299, %v298
    %316 = vmatprep.subr.bf16.mxu0 0
    %317 = vmatpush1.bf16.msra.mxu0 %v300
    %318 = vmatprep.subr.bf16.mxu0 0
    %319 = vmatpush1.bf16.msra.mxu0 %v301
    %320 = vmatprep.subr.bf16.mxu0 0
    %321 = vmatpush1.bf16.msra.mxu0 %v302
    %322 = vmatprep.subr.bf16.mxu0 0
    %323 = vmatpush1.bf16.msra.mxu0 %v303
    %324 = vmatprep.subr.bf16.mxu0 0
    %325 = vmatpush1.bf16.msra.mxu0 %v304
    %326 = vmatprep.subr.bf16.mxu0 0
    %327 = vmatpush1.bf16.msra.mxu0 %v305
    %328 = vmatprep.subr.bf16.mxu0 0
    %329 = vmatpush1.bf16.msra.mxu0 %v306
    %330 = vmatprep.subr.bf16.mxu0 0
    %331 = vmatpush1.bf16.msra.mxu0 %v307
    %332 = vmatprep.subr.bf16.mxu0 0
    %333 = vmatpush1.bf16.msra.mxu0 0
    %334 = vmatprep.subr.bf16.mxu0 0
    %335 = vmatpush1.bf16.msra.mxu0 0
    %336 = vmatprep.subr.bf16.mxu0 0
    %337 = vmatpush1.bf16.msra.mxu0 0
    %338 = vmatprep.subr.bf16.mxu0 0
    %339 = vmatpush1.bf16.msra.mxu0 0
    %340 = vmatprep.subr.bf16.mxu0 0
    %341 = vmatpush1.bf16.msra.mxu0 0
    %342 = vmatprep.subr.bf16.mxu0 0
    %343 = vmatpush1.bf16.msra.mxu0 0
    %344 = vmatprep.subr.bf16.mxu0 0
    %345 = vmatpush1.bf16.msra.mxu0 0
    %346 = vmatprep.subr.bf16.mxu0 0
    %347 = vmatpush1.bf16.msra.mxu0 0
    %348 = vmatprep.mubr.bf16.mxu0 0
    %349 = vmatmul.mubr.bf16.gmra.mrb[0].mxu0 %v246
    %v350 = vpop.f32.mrb[0].mxu0
    %v351 = vadd.f32 %v267, %v350
    %v352 = vpop.f32.mrb[0].mxu0
    %v353 = vpop.f32.mrb[0].mxu0
    %v354 = vpop.f32.mrb[0].mxu0
    %355 = vdwg.mxu0
    %356 = vst [vmem:[#allocation8] sm:$0x3] %v351
    // Predicated region
    $region30: #{tpu_custom_call.1} parent=1 // pred_check
      _
    $region31: #{tpu_custom_call.1} parent=1 // pred_check_branch
      %358 = sbr.rel (0) target = $region33
    $region32: #{tpu_custom_call.1} parent=1 // pred_region
      %s360 = ssub.s32 32, 32
      %361 = vsyncadd [#allocation4], %s360
      %s363 = sshll.u32 [#allocation8], 4
      %s364 = int_to_ptr.vmem [resolvable:$true] %s363
      %366 = dma.vmem_to_hbm [thread:$0]  %s364, 32, %s4, [#allocation4]
    $region33: #{tpu_custom_call.1} parent=1 // pred_fallthru
      _
    // Predicated region
    $region34: #{tpu_custom_call.1} parent=1 // pred_check
      _
    $region35: #{tpu_custom_call.1} parent=1 // pred_check_branch
      %368 = sbr.rel (0) target = $region37
    $region36: #{tpu_custom_call.1} parent=1 // pred_region
      %369 = dma.done [#allocation4], 32
    $region37: #{tpu_custom_call.1} parent=1 // pred_fallthru
      _
    %370 = vsyncpa [#allocation3], 1
    %371 = vsyncpa [#allocation6], 1
    %372 = vsyncpa [#allocation4], 1

</llo_original>
